<compile_context>
chip_gen: v6e
topology: v6e:2x2x1
jax: 0.10.0
libtpu: 0.0.40
codegen_flags: <defaults>
</compile_context>

<pallas_src>
import functools

import jax
import jax.numpy as jnp
from jax.experimental import pallas as pl
from jax.experimental.pallas import tpu as pltpu


def _round_up(x, m):
    return ((x + m - 1) // m) * m


def _neuralnet_kernel(x_ref, w1_ref, b1_ref, w34_ref, b34_ref, out_ref, *,
                      action_size):
    w_dtype = w1_ref.dtype

    # fc1 + ReLU (MXU accumulates f32; bias add / ReLU stay f32)
    x = x_ref[...]
    if x.dtype != w_dtype:
        x = x.astype(w_dtype)
    h = jnp.dot(x, w1_ref[...], preferred_element_type=jnp.float32) + b1_ref[...]
    h = jnp.maximum(h, 0.0)
    if h.dtype != w_dtype:
        h = h.astype(w_dtype)

    # fused fc3||fc4: one lane-dense (TILE_B, OUT_PAD) MXU pass
    out = jnp.dot(h, w34_ref[...], preferred_element_type=jnp.float32) + b34_ref[...]
    out_pad = out.shape[1]

    col = jax.lax.broadcasted_iota(jnp.int32, out.shape, dimension=1)
    pi_mask = col < action_size                    # lanes [0, A) hold fc3 logits

    # softmax over the real action lanes only (padded lanes masked to -inf).
    logits = jnp.where(pi_mask, out, -jnp.inf)
    m = jnp.max(logits, axis=1, keepdims=True)
    e = jnp.exp(logits - m)                        # exp(-inf) == 0 on padded lanes
    denom = jnp.sum(e, axis=1, keepdims=True)
    pi = e / denom                                 # exact divide: rows sum to 1

    # value head: tanh only on the 128-lane block that contains column A
    # (avoids burning the single EUP slot on discarded lanes once A >= 128).
    vb = (action_size // 128) * 128                # static
    v_tanh = jnp.tanh(out[:, vb:vb + 128])
    blk = jnp.where(col[:, vb:vb + 128] == action_size, v_tanh, pi[:, vb:vb + 128])
    if out_pad == 128:
        slab = blk
    else:
        slab = jax.lax.dynamic_update_slice(pi, blk, (0, vb))

    out_ref[...] = slab.astype(out_ref.dtype)


def prepare_params(params, *, use_bf16_mxu=True):
    """One-time weight prep: fuse fc3||fc4, lane/hidden pad, optional bf16 cast.

    Hoisted out of the per-call path so each forward is a single pallas_call.
    """
    w1, b1, w3, b3, w4, b4 = params
    input_size, hidden = w1.shape
    A = w3.shape[1]
    H_PAD = _round_up(hidden, 128)                 # lane-dense h, full-K MXU pass
    OUT_PAD = max(128, _round_up(A + 1, 128))      # lane-dense output slab

    w1p = jnp.zeros((input_size, H_PAD), jnp.float32).at[:, :hidden].set(w1)
    b1p = jnp.zeros((1, H_PAD), jnp.float32).at[:, :hidden].set(
        jnp.reshape(b1, (1, -1)))
    w34 = jnp.zeros((H_PAD, OUT_PAD), jnp.float32)
    w34 = w34.at[:hidden, :A].set(w3).at[:hidden, A:A + 1].set(w4)
    b34 = jnp.zeros((1, OUT_PAD), jnp.float32)
    b34 = b34.at[:, :A].set(jnp.reshape(b3, (1, -1)))
    b34 = b34.at[:, A:A + 1].set(jnp.reshape(b4, (1, -1)))

    w_dtype = jnp.bfloat16 if use_bf16_mxu else jnp.float32
    return {
        "w1": w1p.astype(w_dtype), "b1": b1p,       # biases stay f32 (post-MXU add)
        "w34": w34.astype(w_dtype), "b34": b34,
        "action_size": A, "input_size": input_size,
    }


def neuralnet_forward(data, prepared, *, tile_b=1024, out_dtype=None):
    """Pallas forward of NeuralNet. Returns (pi, v) = (softmax(fc3(h)), tanh(fc4(h)))."""
    B, input_size = data.shape
    assert input_size == prepared["w1"].shape[0]
    A = prepared["action_size"]
    H_PAD = prepared["w1"].shape[1]
    OUT_PAD = prepared["w34"].shape[1]
    if out_dtype is None:
        # bf16 writeback on the fast path halves the dominant HBM traffic.
        out_dtype = (jnp.bfloat16 if prepared["w1"].dtype == jnp.bfloat16
                     else jnp.float32)

    # Batch tiling: amortize the ~0.35us/step fixed cost with big tiles; keep
    # >= 2 grid steps when the batch is large enough (v7x megacore), and use a
    # single full-dim block (always layout-legal) for small batches.
    tile_b = max(8, _round_up(tile_b, 8))
    if B > tile_b:
        TILE_B = tile_b
    elif B >= 1024:
        TILE_B = _round_up(-(-B // 2), 8)          # 2 steps, >= 512 rows each
    else:
        TILE_B = B                                 # single step, no padding
    grid = (pl.cdiv(B, TILE_B),)                   # ragged last block is masked

    kernel = functools.partial(_neuralnet_kernel, action_size=A)
    slab = pl.pallas_call(
        kernel,
        out_shape=jax.ShapeDtypeStruct((B, OUT_PAD), out_dtype),
        grid_spec=pltpu.PrefetchScalarGridSpec(
            num_scalar_prefetch=0,
            grid=grid,
            in_specs=[
                pl.BlockSpec((TILE_B, input_size), lambda i: (i, 0)),  # x: batch-tiled
                pl.BlockSpec((input_size, H_PAD), lambda i: (0, 0)),   # w1: resident
                pl.BlockSpec((1, H_PAD), lambda i: (0, 0)),            # b1: resident
                pl.BlockSpec((H_PAD, OUT_PAD), lambda i: (0, 0)),      # fused w3||w4
                pl.BlockSpec((1, OUT_PAD), lambda i: (0, 0)),          # fused b3||b4
            ],
            out_specs=pl.BlockSpec((TILE_B, OUT_PAD), lambda i: (i, 0)),
        ),
        compiler_params=pltpu.CompilerParams(
            dimension_semantics=("parallel",)),    # shards batch steps on v7x
    )(data, prepared["w1"], prepared["b1"], prepared["w34"], prepared["b34"])

    pi = slab[:, :A]
    v = slab[:, A:A + 1]
    return pi, v


def init_params(key, input_size, hidden_size, action_size):
    """Deterministic synthetic init (shapes match the nn.Linear layers)."""
    k1, k2, k3, k4, k5, k6 = jax.random.split(key, 6)
    # stored as (in, out); biases kept 2-D (1, out) for clean TPU broadcasting.
    w1 = jax.random.normal(k1, (input_size, hidden_size), jnp.float32) * 0.1
    b1 = jax.random.normal(k2, (1, hidden_size), jnp.float32) * 0.1
    w3 = jax.random.normal(k3, (hidden_size, action_size), jnp.float32) * 0.1
    b3 = jax.random.normal(k4, (1, action_size), jnp.float32) * 0.1
    w4 = jax.random.normal(k5, (hidden_size, 1), jnp.float32) * 0.1
    b4 = jax.random.normal(k6, (1, 1), jnp.float32) * 0.1
    return w1, b1, w3, b3, w4, b4


def _reference(data, params):
    w1, b1, w3, b3, w4, b4 = params
    h = jnp.maximum(data @ w1 + b1, 0.0)
    pi = jax.nn.softmax(h @ w3 + b3, axis=1)
    v = jnp.tanh(h @ w4 + b4)
    return pi, v


if __name__ == "__main__":
    # Small shapes consistent with the module: data is a 2-D [board, pi] tensor.
    batch, input_size, hidden_size, action_size = 8, 32, 32, 16

    key = jax.random.PRNGKey(0)
    kx, kp = jax.random.split(key)
    data = jax.random.normal(kx, (batch, input_size), jnp.float32)
    params = init_params(kp, input_size, hidden_size, action_size)

    prep_f32 = prepare_params(params, use_bf16_mxu=False)   # accuracy-check path
    prep_fast = prepare_params(params)                       # default: bf16 MXU + bf16 out

    # f32 path, single grid step, exact-divide softmax
    pi, v = neuralnet_forward(data, prep_f32, out_dtype=jnp.float32)
    jax.block_until_ready((pi, v))
    pi_ref, v_ref = _reference(data, params)
    assert pi.shape == (batch, action_size) and v.shape == (batch, 1)
    assert jnp.allclose(pi, pi_ref, atol=2e-3, rtol=2e-3)
    assert jnp.allclose(v, v_ref, atol=2e-3, rtol=2e-3)
    assert jnp.allclose(jnp.sum(pi, axis=1), 1.0, atol=1e-3)

    # multi-step grid with a ragged last block (no wrapper-side batch padding)
    data2 = jax.random.normal(jax.random.PRNGKey(1), (260, input_size), jnp.float32)
    pi2, v2 = neuralnet_forward(data2, prep_f32, tile_b=128, out_dtype=jnp.float32)
    jax.block_until_ready((pi2, v2))
    pi2_ref, v2_ref = _reference(data2, params)
    assert pi2.shape == (260, action_size) and v2.shape == (260, 1)
    assert jnp.allclose(pi2, pi2_ref, atol=2e-3, rtol=2e-3)
    assert jnp.allclose(v2, v2_ref, atol=2e-3, rtol=2e-3)
    assert jnp.allclose(jnp.sum(pi2, axis=1), 1.0, atol=1e-3)

    # default fast path: bf16 MXU operands + bf16 output slab (f32 elementwise)
    pi3, v3 = neuralnet_forward(data2, prep_fast, tile_b=128)
    jax.block_until_ready((pi3, v3))
    assert pi3.dtype == jnp.bfloat16 and v3.dtype == jnp.bfloat16
    assert jnp.allclose(pi3.astype(jnp.float32), pi2_ref, atol=3e-2, rtol=3e-2)
    assert jnp.allclose(v3.astype(jnp.float32), v2_ref, atol=3e-2, rtol=3e-2)

    # caller-supplied bf16 activations (halved x DMA, no in-kernel cast),
    # single full-dim block under the default tile_b
    pi4, v4 = neuralnet_forward(data2.astype(jnp.bfloat16), prep_fast)
    jax.block_until_ready((pi4, v4))
    assert jnp.allclose(pi4.astype(jnp.float32), pi2_ref, atol=3e-2, rtol=3e-2)
    assert jnp.allclose(v4.astype(jnp.float32), v2_ref, atol=3e-2, rtol=3e-2)

    print("KERNEL_OK")
</pallas_src>

<mosaic_0001>
module attributes {stable_mosaic.version = 11 : i64} {
  func.func @_neuralnet_kernel(%arg0: i32, %arg1: memref<8x32xf32, #tpu.memory_space<vmem>>, %arg2: memref<32x128xf32, #tpu.memory_space<vmem>>, %arg3: memref<1x128xf32, #tpu.memory_space<vmem>>, %arg4: memref<128x128xf32, #tpu.memory_space<vmem>>, %arg5: memref<1x128xf32, #tpu.memory_space<vmem>>, %arg6: memref<8x128xf32, #tpu.memory_space<vmem>>) attributes {dimension_semantics = [#tpu.dimension_semantics<parallel>], iteration_bounds = array<i64: 1>, scalar_prefetch = 0 : i64, scratch_operands = 0 : i64, tpu.core_type = #tpu.core_type<tc>, window_params = [{transform_indices = @transform_0, window_bounds = array<i64: 8, 32>}, {pipeline_mode = #tpu.pipeline_mode<synchronous>, transform_indices = @transform_1, window_bounds = array<i64: 32, 128>}, {pipeline_mode = #tpu.pipeline_mode<synchronous>, transform_indices = @transform_2, window_bounds = array<i64: 1, 128>}, {pipeline_mode = #tpu.pipeline_mode<synchronous>, transform_indices = @transform_3, window_bounds = array<i64: 128, 128>}, {pipeline_mode = #tpu.pipeline_mode<synchronous>, transform_indices = @transform_4, window_bounds = array<i64: 1, 128>}, {transform_indices = @transform_5, window_bounds = array<i64: 8, 128>}]} {
    %c0 = arith.constant 0 : index
    %c0_0 = arith.constant 0 : index
    %0 = vector.load %arg1[%c0, %c0_0] : memref<8x32xf32, #tpu.memory_space<vmem>>, vector<8x32xf32>
    %c0_1 = arith.constant 0 : index
    %c0_2 = arith.constant 0 : index
    %1 = vector.load %arg2[%c0_1, %c0_2] : memref<32x128xf32, #tpu.memory_space<vmem>>, vector<32x128xf32>
    %cst = arith.constant dense<0.000000e+00> : vector<8x128xf32>
    %2 = tpu.matmul %0, %1, %cst {dimension_numbers = #tpu.dot_dimension_numbers<[1], [0], [0], [1], [0, 0, 1, 1], [], []>} : vector<8x32xf32>, vector<32x128xf32>, vector<8x128xf32> -> vector<8x128xf32>
    %c0_3 = arith.constant 0 : index
    %c0_4 = arith.constant 0 : index
    %3 = vector.load %arg3[%c0_3, %c0_4] : memref<1x128xf32, #tpu.memory_space<vmem>>, vector<1x128xf32>
    %4 = vector.broadcast %3 : vector<1x128xf32> to vector<8x128xf32>
    %5 = arith.addf %2, %4 : vector<8x128xf32>
    %cst_5 = arith.constant 0.000000e+00 : f32
    %6 = vector.broadcast %cst_5 : f32 to vector<8x128xf32>
    %7 = arith.maximumf %5, %6 : vector<8x128xf32>
    %c0_6 = arith.constant 0 : index
    %c0_7 = arith.constant 0 : index
    %8 = vector.load %arg4[%c0_6, %c0_7] : memref<128x128xf32, #tpu.memory_space<vmem>>, vector<128x128xf32>
    %cst_8 = arith.constant dense<0.000000e+00> : vector<8x128xf32>
    %9 = tpu.matmul %7, %8, %cst_8 {dimension_numbers = #tpu.dot_dimension_numbers<[1], [0], [0], [1], [0, 0, 1, 1], [], []>} : vector<8x128xf32>, vector<128x128xf32>, vector<8x128xf32> -> vector<8x128xf32>
    %c0_9 = arith.constant 0 : index
    %c0_10 = arith.constant 0 : index
    %10 = vector.load %arg5[%c0_9, %c0_10] : memref<1x128xf32, #tpu.memory_space<vmem>>, vector<1x128xf32>
    %11 = vector.broadcast %10 : vector<1x128xf32> to vector<8x128xf32>
    %12 = arith.addf %9, %11 : vector<8x128xf32>
    %13 = tpu.iota {dimensions = array<i32: 1>} : vector<8x128xi32>
    %c16_i32 = arith.constant 16 : i32
    %14 = vector.broadcast %c16_i32 : i32 to vector<8x128xi32>
    %15 = arith.cmpi slt, %13, %14 : vector<8x128xi32>
    %cst_11 = arith.constant 0xFF800000 : f32
    %16 = vector.broadcast %cst_11 : f32 to vector<8x128xf32>
    %17 = arith.select %15, %12, %16 : vector<8x128xi1>, vector<8x128xf32>
    %cst_12 = arith.constant dense<0xFF800000> : vector<8xf32>
    %18 = vector.multi_reduction <maximumf>, %17, %cst_12 [1] : vector<8x128xf32> to vector<8xf32>
    %19 = vector.shape_cast %18 : vector<8xf32> to vector<8x1xf32>
    %20 = vector.broadcast %19 : vector<8x1xf32> to vector<8x128xf32>
    %21 = arith.subf %17, %20 : vector<8x128xf32>
    %22 = math.exp %21 : vector<8x128xf32>
    %cst_13 = arith.constant dense<0.000000e+00> : vector<8xf32>
    %23 = vector.multi_reduction <add>, %22, %cst_13 [1] : vector<8x128xf32> to vector<8xf32>
    %24 = vector.shape_cast %23 : vector<8xf32> to vector<8x1xf32>
    %25 = vector.broadcast %24 : vector<8x1xf32> to vector<8x128xf32>
    %26 = arith.divf %22, %25 : vector<8x128xf32>
    %27 = math.tanh %12 : vector<8x128xf32>
    %c16_i32_14 = arith.constant 16 : i32
    %28 = vector.broadcast %c16_i32_14 : i32 to vector<8x128xi32>
    %29 = arith.cmpi eq, %13, %28 : vector<8x128xi32>
    %30 = arith.select %29, %27, %26 : vector<8x128xi1>, vector<8x128xf32>
    %c0_15 = arith.constant 0 : index
    %c0_16 = arith.constant 0 : index
    %31 = vector.load %arg6[%c0_15, %c0_16] : memref<8x128xf32, #tpu.memory_space<vmem>>, vector<8x128xf32>
    tpu.vector_store %arg6[%c0_15, %c0_16], %30 {strides = array<i32>} : memref<8x128xf32, #tpu.memory_space<vmem>>, vector<8x128xf32>,
    return
  }
  func.func @transform_0(%arg0: i32) -> (i32, i32) {
    %c0_i32 = arith.constant 0 : i32
    %c0_i32_0 = arith.constant 0 : i32
    return %arg0, %c0_i32 : i32, i32
  }
  func.func @transform_1(%arg0: i32) -> (i32, i32) {
    %c0_i32 = arith.constant 0 : i32
    %c0_i32_0 = arith.constant 0 : i32
    %c0_i32_1 = arith.constant 0 : i32
    return %c0_i32, %c0_i32_0 : i32, i32
  }
  func.func @transform_2(%arg0: i32) -> (i32, i32) {
    %c0_i32 = arith.constant 0 : i32
    %c0_i32_0 = arith.constant 0 : i32
    %c0_i32_1 = arith.constant 0 : i32
    return %c0_i32, %c0_i32_0 : i32, i32
  }
  func.func @transform_3(%arg0: i32) -> (i32, i32) {
    %c0_i32 = arith.constant 0 : i32
    %c0_i32_0 = arith.constant 0 : i32
    %c0_i32_1 = arith.constant 0 : i32
    return %c0_i32, %c0_i32_0 : i32, i32
  }
  func.func @transform_4(%arg0: i32) -> (i32, i32) {
    %c0_i32 = arith.constant 0 : i32
    %c0_i32_0 = arith.constant 0 : i32
    %c0_i32_1 = arith.constant 0 : i32
    return %c0_i32, %c0_i32_0 : i32, i32
  }
  func.func @transform_5(%arg0: i32) -> (i32, i32) {
    %c0_i32 = arith.constant 0 : i32
    %c0_i32_0 = arith.constant 0 : i32
    return %arg0, %c0_i32 : i32, i32
  }
}

</mosaic_0001>

<llo_original>
// kernel: tpu_custom_call.1
$region0: #{tpu_custom_call.1}
  #allocation0 [shape = 'u32[]', space=smem, size = 0x4, offset = 0x4, fixed_abs, tag = 'smem constant byte address 0x4 - core index']
  #allocation1 [shape = 'u32[144,128]{1,0:T(1,128)}', space=vmem, size = 0x12000, scoped, tag = 'internal scratch']
  %s0 = inlined_call_operand.hbm [shape: f32[8,32], index: 0, kind: input, shape index: {}]
  %s1 = inlined_call_operand.hbm [shape: f32[32,128], index: 1, kind: input, shape index: {}]
  %s2 = inlined_call_operand.vmem [shape: f32[1,128], index: 2, kind: input, shape index: {}]
  %s3 = inlined_call_operand.hbm [shape: f32[128,128], index: 3, kind: input, shape index: {}]
  %s4 = inlined_call_operand.vmem [shape: f32[1,128], index: 4, kind: input, shape index: {}]
  %s5 = inlined_call_operand.hbm [shape: f32[8,128], index: 5, kind: output, shape index: {}]
  %s6 = sld [smem:[#allocation0]]
  $region42: #{tpu_custom_call.1} parent=0
    _
  %s8 = ssub.s32 1, %s6
  %s9 = scalar_select 0, %s8, %s6
  $region1: #{tpu_custom_call.1} parent=0
    #allocation2 [shape = 'u8[4096]{0}', space=vmem, size = 0x1000, scoped, tag = 'input window, operand 0, single buffered']
    #allocation3 [shape = 's32[1]{0}', space=sflag, size = 0x4, scoped, tag = 'scoped memory for tpu_custom_call.1']
    #allocation4 [shape = 's32[1]{0}', space=sflag, size = 0x4, scoped, tag = 'scoped memory for tpu_custom_call.1']
    #allocation5 [shape = 'u8[16384]{0}', space=vmem, size = 0x4000, scoped, tag = 'input window, operand 1, single buffered']
    #allocation6 [shape = 's32[1]{0}', space=sflag, size = 0x4, scoped, tag = 'scoped memory for tpu_custom_call.1']
    #allocation7 [shape = 'u8[65536]{0}', space=vmem, size = 0x10000, scoped, tag = 'input window, operand 3, single buffered']
    #allocation8 [shape = 'u8[4096]{0}', space=vmem, size = 0x1000, scoped, tag = 'output window, operand 0, single buffered']
    %10 = vsyncpa [#allocation3], 0
    %11 = vsyncpa [#allocation6], 0
    %12 = vsyncpa [#allocation4], 0
    // Predicated region
    $region2: #{tpu_custom_call.1} parent=1 // pred_check
      _
    $region3: #{tpu_custom_call.1} parent=1 // pred_check_branch
      %14 = sbr.rel (0) target = $region5
    $region4: #{tpu_custom_call.1} parent=1 // pred_region
      %s16 = ssub.s32 128, 128
      %17 = vsyncadd [#allocation3], %s16
      %s19 = sshll.u32 [#allocation2], 4
      %s20 = int_to_ptr.vmem [resolvable:$true] %s19
      %22 = dma.hbm_to_vmem [thread:$0]  %s0, 128, %s20, [#allocation3]
    $region5: #{tpu_custom_call.1} parent=1 // pred_fallthru
      _
    // Predicated region
    $region6: #{tpu_custom_call.1} parent=1 // pred_check
      _
    $region7: #{tpu_custom_call.1} parent=1 // pred_check_branch
      %24 = sbr.rel (0) target = $region9
    $region8: #{tpu_custom_call.1} parent=1 // pred_region
      %s26 = ssub.s32 512, 512
      %27 = vsyncadd [#allocation6], %s26
      %s28 = sshll.u32 [#allocation5], 4
      %s29 = int_to_ptr.vmem [resolvable:$true] %s28
      %34 = dma.hbm_to_vmem [thread:$0]  %s1, 512, %s29, [#allocation6], 128, 128, 8
    $region9: #{tpu_custom_call.1} parent=1 // pred_fallthru
      _
    // Predicated region
    $region10: #{tpu_custom_call.1} parent=1 // pred_check
      _
    $region11: #{tpu_custom_call.1} parent=1 // pred_check_branch
      %36 = sbr.rel (0) target = $region13
    $region12: #{tpu_custom_call.1} parent=1 // pred_region
      _
    $region13: #{tpu_custom_call.1} parent=1 // pred_fallthru
      _
    // Predicated region
    $region14: #{tpu_custom_call.1} parent=1 // pred_check
      _
    $region15: #{tpu_custom_call.1} parent=1 // pred_check_branch
      %38 = sbr.rel (0) target = $region17
    $region16: #{tpu_custom_call.1} parent=1 // pred_region
      %s40 = ssub.s32 2048, 2048
      %41 = vsyncadd [#allocation6], %s40
      %s42 = sshll.u32 [#allocation7], 4
      %s43 = int_to_ptr.vmem [resolvable:$true] %s42
      %48 = dma.hbm_to_vmem [thread:$0]  %s3, 2048, %s43, [#allocation6], 128, 128, 8
    $region17: #{tpu_custom_call.1} parent=1 // pred_fallthru
      _
    // Predicated region
    $region18: #{tpu_custom_call.1} parent=1 // pred_check
      _
    $region19: #{tpu_custom_call.1} parent=1 // pred_check_branch
      %50 = sbr.rel (0) target = $region21
    $region20: #{tpu_custom_call.1} parent=1 // pred_region
      _
    $region21: #{tpu_custom_call.1} parent=1 // pred_fallthru
      _
    // Predicated region
    $region22: #{tpu_custom_call.1} parent=1 // pred_check
      _
    $region23: #{tpu_custom_call.1} parent=1 // pred_check_branch
      %52 = sbr.rel (0) target = $region25
    $region24: #{tpu_custom_call.1} parent=1 // pred_region
      %53 = dma.done [#allocation3], 128
    $region25: #{tpu_custom_call.1} parent=1 // pred_fallthru
      _
    // Predicated region
    $region26: #{tpu_custom_call.1} parent=1 // pred_check
      _
    $region27: #{tpu_custom_call.1} parent=1 // pred_check_branch
      %55 = sbr.rel (0) target = $region29
    $region28: #{tpu_custom_call.1} parent=1 // pred_region
      %56 = dma.done [#allocation6], 512
    $region29: #{tpu_custom_call.1} parent=1 // pred_fallthru
      _
    // Predicated region
    $region30: #{tpu_custom_call.1} parent=1 // pred_check
      _
    $region31: #{tpu_custom_call.1} parent=1 // pred_check_branch
      %58 = sbr.rel (0) target = $region33
    $region32: #{tpu_custom_call.1} parent=1 // pred_region
      %59 = dma.done [#allocation6], 2048
    $region33: #{tpu_custom_call.1} parent=1 // pred_fallthru
      _
    %v60 = vld [vmem:[#allocation2] sm:$0xff]
    %v61 = vld [vmem:[#allocation5] sm:$0xff]
    %v62 = vld [vmem:[#allocation5 + $0x8] sm:$0xff]
    %v63 = vld [vmem:[#allocation5 + $0x10] sm:$0xff]
    %v64 = vld [vmem:[#allocation5 + $0x18] sm:$0xff]
    %v65 = vld [vmem:[%s2] sm:$0x1]
    %v67 = vlaneseq
    %v68 = vshrl.u32 %v67, 7
    %v69 = vsub.s32 0, %v68
    %v70 = vrot.slane %v65, %v69
    %vm72 = vcmask 261120
    %v74 = vsel %vm72, %v60, 0
    %76 = vmatprep.subr.mxu0 0.0
    %77 = vmatpush1.msra.mxu0 0.0
    %78 = vmatprep.subr.mxu0 0.0
    %79 = vmatpush1.msra.mxu0 0.0
    %80 = vmatprep.subr.mxu0 0.0
    %81 = vmatpush1.msra.mxu0 0.0
    %82 = vmatprep.subr.mxu0 0.0
    %83 = vmatpush1.msra.mxu0 0.0
    %84 = vmatprep.subr.mxu0 0.0
    %85 = vmatpush1.msra.mxu0 0.0
    %86 = vmatprep.subr.mxu0 0.0
    %87 = vmatpush1.msra.mxu0 0.0
    %88 = vmatprep.subr.mxu0 0.0
    %89 = vmatpush1.msra.mxu0 0.0
    %90 = vmatprep.subr.mxu0 0.0
    %91 = vmatpush1.msra.mxu0 0.0
    %92 = vmatprep.subr.mxu0 0.0
    %93 = vmatpush1.msra.mxu0 0.0
    %94 = vmatprep.subr.mxu0 0.0
    %95 = vmatpush1.msra.mxu0 0.0
    %96 = vmatprep.subr.mxu0 0.0
    %97 = vmatpush1.msra.mxu0 0.0
    %98 = vmatprep.subr.mxu0 0.0
    %99 = vmatpush1.msra.mxu0 0.0
    %100 = vmatprep.subr.mxu0 0.0
    %101 = vmatpush1.msra.mxu0 %v64
    %102 = vmatprep.subr.mxu0 0.0
    %103 = vmatpush1.msra.mxu0 %v63
    %104 = vmatprep.subr.mxu0 0.0
    %105 = vmatpush1.msra.mxu0 %v62
    %106 = vmatprep.subr.mxu0 0.0
    %107 = vmatpush1.msra.mxu0 %v61
    %108 = vmatprep.subr.mxu0 0.0
    %109 = vmatpush2.msra.mxu0 0.0
    %110 = vmatprep.subr.mxu0 0.0
    %111 = vmatpush2.msra.mxu0 0.0
    %112 = vmatprep.subr.mxu0 0.0
    %113 = vmatpush2.msra.mxu0 0.0
    %114 = vmatprep.subr.mxu0 0.0
    %115 = vmatpush2.msra.mxu0 0.0
    %116 = vmatprep.subr.mxu0 0.0
    %117 = vmatpush2.msra.mxu0 0.0
    %118 = vmatprep.subr.mxu0 0.0
    %119 = vmatpush2.msra.mxu0 0.0
    %120 = vmatprep.subr.mxu0 0.0
    %121 = vmatpush2.msra.mxu0 0.0
    %122 = vmatprep.subr.mxu0 0.0
    %123 = vmatpush2.msra.mxu0 0.0
    %124 = vmatprep.subr.mxu0 0.0
    %125 = vmatpush2.msra.mxu0 0.0
    %126 = vmatprep.subr.mxu0 0.0
    %127 = vmatpush2.msra.mxu0 0.0
    %128 = vmatprep.subr.mxu0 0.0
    %129 = vmatpush2.msra.mxu0 0.0
    %130 = vmatprep.subr.mxu0 0.0
    %131 = vmatpush2.msra.mxu0 0.0
    %132 = vmatprep.subr.mxu0 0.0
    %133 = vmatpush2.msra.mxu0 0.0
    %134 = vmatprep.subr.mxu0 0.0
    %135 = vmatpush2.msra.mxu0 0.0
    %136 = vmatprep.subr.mxu0 0.0
    %137 = vmatpush2.msra.mxu0 0.0
    %138 = vmatprep.subr.mxu0 0.0
    %139 = vmatpush2.msra.mxu0 0.0
    %140 = vmatprep.mubr.f32.mxu0 0.0
    %141 = vmatmul.mubr.f32.gmra.mxu0 %v74
    %v142 = vpop.f32.mrf.mxu0
    %v143 = vadd.f32 %v70, %v142
    %v144 = vpop.f32.mrf.mxu0
    %145 = vdwg.mxu0
    %v146 = vmax.f32 %v143, 0.0
    %v147 = vld [vmem:[#allocation7] sm:$0xff]
    %v148 = vld [vmem:[#allocation7 + $0x8] sm:$0xff]
    %v149 = vld [vmem:[#allocation7 + $0x10] sm:$0xff]
    %v150 = vld [vmem:[#allocation7 + $0x18] sm:$0xff]
    %v151 = vld [vmem:[#allocation7 + $0x20] sm:$0xff]
    %v152 = vld [vmem:[#allocation7 + $0x28] sm:$0xff]
    %v153 = vld [vmem:[#allocation7 + $0x30] sm:$0xff]
    %v154 = vld [vmem:[#allocation7 + $0x38] sm:$0xff]
    %v155 = vld [vmem:[#allocation7 + $0x40] sm:$0xff]
    %v156 = vld [vmem:[#allocation7 + $0x48] sm:$0xff]
    %v157 = vld [vmem:[#allocation7 + $0x50] sm:$0xff]
    %v158 = vld [vmem:[#allocation7 + $0x58] sm:$0xff]
    %v159 = vld [vmem:[#allocation7 + $0x60] sm:$0xff]
    %v160 = vld [vmem:[#allocation7 + $0x68] sm:$0xff]
    %v161 = vld [vmem:[#allocation7 + $0x70] sm:$0xff]
    %v162 = vld [vmem:[#allocation7 + $0x78] sm:$0xff]
    %v163 = vld [vmem:[%s4] sm:$0x1]
    %v165 = vlaneseq
    %v166 = vshrl.u32 %v165, 7
    %v167 = vsub.s32 0, %v166
    %v168 = vrot.slane %v163, %v167
    %170 = vmatprep.subr.mxu0 0.0
    %171 = vmatpush1.msra.mxu0 %v162
    %172 = vmatprep.subr.mxu0 0.0
    %173 = vmatpush1.msra.mxu0 %v161
    %174 = vmatprep.subr.mxu0 0.0
    %175 = vmatpush1.msra.mxu0 %v160
    %176 = vmatprep.subr.mxu0 0.0
    %177 = vmatpush1.msra.mxu0 %v159
    %178 = vmatprep.subr.mxu0 0.0
    %179 = vmatpush1.msra.mxu0 %v158
    %180 = vmatprep.subr.mxu0 0.0
    %181 = vmatpush1.msra.mxu0 %v157
    %182 = vmatprep.subr.mxu0 0.0
    %183 = vmatpush1.msra.mxu0 %v156
    %184 = vmatprep.subr.mxu0 0.0
    %185 = vmatpush1.msra.mxu0 %v155
    %186 = vmatprep.subr.mxu0 0.0
    %187 = vmatpush1.msra.mxu0 %v154
    %188 = vmatprep.subr.mxu0 0.0
    %189 = vmatpush1.msra.mxu0 %v153
    %190 = vmatprep.subr.mxu0 0.0
    %191 = vmatpush1.msra.mxu0 %v152
    %192 = vmatprep.subr.mxu0 0.0
    %193 = vmatpush1.msra.mxu0 %v151
    %194 = vmatprep.subr.mxu0 0.0
    %195 = vmatpush1.msra.mxu0 %v150
    %196 = vmatprep.subr.mxu0 0.0
    %197 = vmatpush1.msra.mxu0 %v149
    %198 = vmatprep.subr.mxu0 0.0
    %199 = vmatpush1.msra.mxu0 %v148
    %200 = vmatprep.subr.mxu0 0.0
    %201 = vmatpush1.msra.mxu0 %v147
    %202 = vmatprep.subr.mxu0 0.0
    %203 = vmatpush2.msra.mxu0 0.0
    %204 = vmatprep.subr.mxu0 0.0
    %205 = vmatpush2.msra.mxu0 0.0
    %206 = vmatprep.subr.mxu0 0.0
    %207 = vmatpush2.msra.mxu0 0.0
    %208 = vmatprep.subr.mxu0 0.0
    %209 = vmatpush2.msra.mxu0 0.0
    %210 = vmatprep.subr.mxu0 0.0
    %211 = vmatpush2.msra.mxu0 0.0
    %212 = vmatprep.subr.mxu0 0.0
    %213 = vmatpush2.msra.mxu0 0.0
    %214 = vmatprep.subr.mxu0 0.0
    %215 = vmatpush2.msra.mxu0 0.0
    %216 = vmatprep.subr.mxu0 0.0
    %217 = vmatpush2.msra.mxu0 0.0
    %218 = vmatprep.subr.mxu0 0.0
    %219 = vmatpush2.msra.mxu0 0.0
    %220 = vmatprep.subr.mxu0 0.0
    %221 = vmatpush2.msra.mxu0 0.0
    %222 = vmatprep.subr.mxu0 0.0
    %223 = vmatpush2.msra.mxu0 0.0
    %224 = vmatprep.subr.mxu0 0.0
    %225 = vmatpush2.msra.mxu0 0.0
    %226 = vmatprep.subr.mxu0 0.0
    %227 = vmatpush2.msra.mxu0 0.0
    %228 = vmatprep.subr.mxu0 0.0
    %229 = vmatpush2.msra.mxu0 0.0
    %230 = vmatprep.subr.mxu0 0.0
    %231 = vmatpush2.msra.mxu0 0.0
    %232 = vmatprep.subr.mxu0 0.0
    %233 = vmatpush2.msra.mxu0 0.0
    %234 = vmatprep.mubr.f32.mxu0 0.0
    %235 = vmatmul.mubr.f32.gmra.mxu0 %v146
    %v236 = vpop.f32.mrf.mxu0
    %v237 = vadd.f32 %v168, %v236
    %v238 = vpop.f32.mrf.mxu0
    %239 = vdwg.mxu0
    %v240 = vlaneseq
    %v241 = vand.u32 %v240, 127
    %vm242 = vcmp.lt.s32.totalorder %v241, 16
    %v243 = vsel %vm242, %v237, -inf
    %244 = vmax.xlane.f32.xlu0 %v243
    %v245 = vpop.xlane.xlu0 %244
    %v246 = vsub.f32 %v243, %v245
    %v247 = vmul.f32 %v246, 1.442695
    %v248 = vpow.pop %v247
    %249 = vadd.xlane.f32.xlu0 %v248
    %v250 = vpop.xlane.xlu0 %249
    %v251 = vrcp.pop %v250
    %v252 = vmul.f32 %v248, %v251
    %v253 = vtanh.pop %v237
    %vm254 = vcmp.eq.s32.totalorder %v241, 16
    %v255 = vsel %vm254, %v253, %v252
    %256 = vst [vmem:[#allocation8] sm:$0xff] %v255
    // Predicated region
    $region34: #{tpu_custom_call.1} parent=1 // pred_check
      _
    $region35: #{tpu_custom_call.1} parent=1 // pred_check_branch
      %258 = sbr.rel (0) target = $region37
    $region36: #{tpu_custom_call.1} parent=1 // pred_region
      %s260 = ssub.s32 128, 128
      %261 = vsyncadd [#allocation4], %s260
      %s263 = sshll.u32 [#allocation8], 4
      %s264 = int_to_ptr.vmem [resolvable:$true] %s263
      %266 = dma.vmem_to_hbm [thread:$0]  %s264, 128, %s5, [#allocation4]
    $region37: #{tpu_custom_call.1} parent=1 // pred_fallthru
      _
    // Predicated region
    $region38: #{tpu_custom_call.1} parent=1 // pred_check
      _
    $region39: #{tpu_custom_call.1} parent=1 // pred_check_branch
      %268 = sbr.rel (0) target = $region41
    $region40: #{tpu_custom_call.1} parent=1 // pred_region
      %269 = dma.done [#allocation4], 128
    $region41: #{tpu_custom_call.1} parent=1 // pred_fallthru
      _
    %270 = vsyncpa [#allocation3], 1
    %271 = vsyncpa [#allocation6], 1
    %272 = vsyncpa [#allocation4], 1

</llo_original>
